<compile_context>
chip_gen: v5e
topology: v5e:2x2
jax: 0.10.0
libtpu: 0.0.40
codegen_flags: <defaults>
</compile_context>

<pallas_src>
import jax
import jax.numpy as jnp
from jax import lax
from jax.experimental import pallas as pl
from jax.experimental.pallas import tpu as pltpu


def _sh_self_attention_kernel(x_ref, wqkv_ref, z_ref, attn_ref):
    bb, t, d = x_ref.shape                                # static block sizes

    # Fused QKV projection: a single (bb*t, d) @ (d, 3d) MXU matmul.
    x2d = x_ref[...].reshape(bb * t, d)
    qkv = jnp.dot(x2d, wqkv_ref[...], preferred_element_type=jnp.float32)   # (bb*t, 3d)

    q = qkv[:, 0 * d:1 * d].reshape(bb, t, d)   # scale D^-1/4 already folded into the weights
    k = qkv[:, 1 * d:2 * d].reshape(bb, t, d)   # scale D^-1/4 already folded into the weights
    v = qkv[:, 2 * d:3 * d].reshape(bb, t, d)

    # Attention logits: contract the last dims directly (no explicit transpose of K).
    logits = lax.dot_general(
        q, k,
        dimension_numbers=(((2,), (2,)), ((0,), (0,))),
        preferred_element_type=jnp.float32)                # (bb, t, t)

    # Numerically safe softmax over the last axis (== nn.Softmax(dim=2)).
    m = jnp.max(logits, axis=-1, keepdims=True)
    e = jnp.exp(logits - m)
    denom = jnp.sum(e, axis=-1, keepdims=True)
    attn = e * pl.reciprocal(denom, approx=True)           # EUP vrcp, frees VALU slots

    z = lax.dot_general(
        attn, v,
        dimension_numbers=(((2,), (1,)), ((0,), (0,))),
        preferred_element_type=jnp.float32)                # (bb, t, d)

    z_ref[...] = z.astype(z_ref.dtype)
    attn_ref[...] = attn.astype(attn_ref.dtype)


def sh_self_attention(x, wq, wk, wv, *, block_b=None):
    """x: (B, T, D); wq/wk/wv: (D, D) PyTorch nn.Linear weights (out_features, in_features)."""
    B, T, D = x.shape
    scale = float(D) ** (-0.25)

    # One-time wrapper glue: transpose to (in, out), fold the scale, fuse Q/K/V into (D, 3D).
    w_qkv = jnp.concatenate([wq.T * scale, wk.T * scale, wv.T], axis=1).astype(x.dtype)

    # Batch rows per grid step: as many as comfortably fit a modest VMEM budget
    # (dominant per-row terms: (T, T) logits/attn and the (T, 3D) qkv block, double-buffered IO).
    if block_b is None:
        bytes_per_row = 4 * (3 * T * T + 6 * T * D)
        budget = 8 << 20                                   # stay well under the scoped VMEM default
        block_b = max(1, min(B, budget // max(bytes_per_row, 1)))
    block_b = max(1, min(block_b, B))
    while B % block_b != 0:                                # keep the grid exact
        block_b -= 1

    # TODO(synk): for very large T (>= ~1024) tile the sequence flash-style (online softmax) so the
    # (T, T) logits block fits v7x's 64 MiB VMEM; unnecessary at the sizes exercised here.

    grid = (B // block_b,)
    cost = pl.CostEstimate(
        flops=6 * B * T * D * D + 4 * B * T * T * D,
        transcendentals=B * T * T,
        bytes_accessed=4 * (2 * B * T * D + B * T * T + 3 * D * D),
    )

    z, attn = pl.pallas_call(
        _sh_self_attention_kernel,
        out_shape=(
            jax.ShapeDtypeStruct((B, T, D), x.dtype),
            jax.ShapeDtypeStruct((B, T, T), x.dtype),
        ),
        grid_spec=pltpu.PrefetchScalarGridSpec(
            num_scalar_prefetch=0,
            grid=grid,
            in_specs=[
                pl.BlockSpec((block_b, T, D), lambda b: (b, 0, 0)),   # X block (several batch rows)
                pl.BlockSpec((D, 3 * D), lambda b: (0, 0)),           # fused, pre-scaled W_qkv^T
            ],
            out_specs=[
                pl.BlockSpec((block_b, T, D), lambda b: (b, 0, 0)),   # z
                pl.BlockSpec((block_b, T, T), lambda b: (b, 0, 0)),   # attention weights
            ],
        ),
        compiler_params=pltpu.CompilerParams(
            dimension_semantics=("parallel",),
        ),
        cost_estimate=cost,
    )(x, w_qkv)
    return z, attn


def _reference(x, wq, wk, wv):
    D = x.shape[-1]
    scale = float(D) ** (-0.25)
    q = jnp.einsum("btd,ed->bte", x, wq) * scale
    k = jnp.einsum("btd,ed->bte", x, wk) * scale
    v = jnp.einsum("btd,ed->bte", x, wv)
    logits = jnp.einsum("bqe,bke->bqk", q, k)
    attn = jax.nn.softmax(logits, axis=-1)
    z = jnp.einsum("bqk,bkd->bqd", attn, v)
    return z, attn


if __name__ == "__main__":
    B, T, D = 2, 8, 32   # batch, sequence length, input_size (= embed_size)
    key = jax.random.PRNGKey(0)
    kx, kq, kk, kv = jax.random.split(key, 4)

    x = jax.random.normal(kx, (B, T, D), dtype=jnp.float32)
    # PyTorch Linear weight shape: (out_features, in_features)
    bound = 1.0 / (D ** 0.5)
    wq = jax.random.uniform(kq, (D, D), minval=-bound, maxval=bound, dtype=jnp.float32)
    wk = jax.random.uniform(kk, (D, D), minval=-bound, maxval=bound, dtype=jnp.float32)
    wv = jax.random.uniform(kv, (D, D), minval=-bound, maxval=bound, dtype=jnp.float32)

    z, attn = sh_self_attention(x, wq, wk, wv)
    jax.block_until_ready((z, attn))

    z_ref, attn_ref = _reference(x, wq, wk, wv)
    # approx=True reciprocal has ~2^-12 relative error; 2e-3 tolerance is comfortably safe.
    assert jnp.allclose(z, z_ref, atol=2e-3, rtol=2e-3), float(jnp.max(jnp.abs(z - z_ref)))
    assert jnp.allclose(attn, attn_ref, atol=2e-3, rtol=2e-3), float(jnp.max(jnp.abs(attn - attn_ref)))

    print("KERNEL_OK")
</pallas_src>

<mosaic_0001>
module attributes {stable_mosaic.version = 11 : i64} {
  func.func @_sh_self_attention_kernel(%arg0: i32, %arg1: memref<2x8x32xf32, #tpu.memory_space<vmem>>, %arg2: memref<32x96xf32, #tpu.memory_space<vmem>>, %arg3: memref<2x8x32xf32, #tpu.memory_space<vmem>>, %arg4: memref<2x8x8xf32, #tpu.memory_space<vmem>>) attributes {dimension_semantics = [#tpu.dimension_semantics<parallel>], iteration_bounds = array<i64: 1>, scalar_prefetch = 0 : i64, scratch_operands = 0 : i64, tpu.core_type = #tpu.core_type<tc>, window_params = [{transform_indices = @transform_0, window_bounds = array<i64: 2, 8, 32>}, {pipeline_mode = #tpu.pipeline_mode<synchronous>, transform_indices = @transform_1, window_bounds = array<i64: 32, 96>}, {transform_indices = @transform_2, window_bounds = array<i64: 2, 8, 32>}, {transform_indices = @transform_3, window_bounds = array<i64: 2, 8, 8>}]} {
    %c0 = arith.constant 0 : index
    %c0_0 = arith.constant 0 : index
    %c0_1 = arith.constant 0 : index
    %0 = vector.load %arg1[%c0, %c0_0, %c0_1] : memref<2x8x32xf32, #tpu.memory_space<vmem>>, vector<2x8x32xf32>
    %1 = vector.shape_cast %0 : vector<2x8x32xf32> to vector<16x32xf32>
    %c0_2 = arith.constant 0 : index
    %c0_3 = arith.constant 0 : index
    %2 = vector.load %arg2[%c0_2, %c0_3] : memref<32x96xf32, #tpu.memory_space<vmem>>, vector<32x96xf32>
    %cst = arith.constant dense<0.000000e+00> : vector<16x96xf32>
    %3 = tpu.matmul %1, %2, %cst {dimension_numbers = #tpu.dot_dimension_numbers<[1], [0], [0], [1], [0, 0, 1, 1], [], []>} : vector<16x32xf32>, vector<32x96xf32>, vector<16x96xf32> -> vector<16x96xf32>
    %4 = vector.extract_strided_slice %3 {offsets = [0, 0], sizes = [16, 32], strides = [1, 1]} : vector<16x96xf32> to vector<16x32xf32>
    %5 = vector.shape_cast %4 : vector<16x32xf32> to vector<2x8x32xf32>
    %6 = vector.extract_strided_slice %3 {offsets = [0, 32], sizes = [16, 32], strides = [1, 1]} : vector<16x96xf32> to vector<16x32xf32>
    %7 = vector.shape_cast %6 : vector<16x32xf32> to vector<2x8x32xf32>
    %8 = vector.extract_strided_slice %3 {offsets = [0, 64], sizes = [16, 32], strides = [1, 1]} : vector<16x96xf32> to vector<16x32xf32>
    %9 = vector.shape_cast %8 : vector<16x32xf32> to vector<2x8x32xf32>
    %cst_4 = arith.constant dense<0.000000e+00> : vector<2x8x8xf32>
    %10 = tpu.matmul %5, %7, %cst_4 {dimension_numbers = #tpu.dot_dimension_numbers<[2], [2], [1], [1], [0, 0, 0, 1, 1, 1], [0], [0]>} : vector<2x8x32xf32>, vector<2x8x32xf32>, vector<2x8x8xf32> -> vector<2x8x8xf32>
    %cst_5 = arith.constant dense<0xFF800000> : vector<2x8xf32>
    %11 = vector.multi_reduction <maximumf>, %10, %cst_5 [2] : vector<2x8x8xf32> to vector<2x8xf32>
    %12 = vector.shape_cast %11 : vector<2x8xf32> to vector<2x8x1xf32>
    %13 = vector.broadcast %12 : vector<2x8x1xf32> to vector<2x8x8xf32>
    %14 = arith.subf %10, %13 : vector<2x8x8xf32>
    %15 = math.exp %14 : vector<2x8x8xf32>
    %cst_6 = arith.constant dense<0.000000e+00> : vector<2x8xf32>
    %16 = vector.multi_reduction <add>, %15, %cst_6 [2] : vector<2x8x8xf32> to vector<2x8xf32>
    %17 = vector.shape_cast %16 : vector<2x8xf32> to vector<2x8x1xf32>
    %18 = tpu.reciprocal %17 {approx = true} : vector<2x8x1xf32> -> vector<2x8x1xf32>
    %19 = vector.broadcast %18 : vector<2x8x1xf32> to vector<2x8x8xf32>
    %20 = arith.mulf %15, %19 : vector<2x8x8xf32>
    %cst_7 = arith.constant dense<0.000000e+00> : vector<2x8x32xf32>
    %21 = tpu.matmul %20, %9, %cst_7 {dimension_numbers = #tpu.dot_dimension_numbers<[2], [1], [1], [2], [0, 0, 0, 1, 1, 2], [0], [0]>} : vector<2x8x8xf32>, vector<2x8x32xf32>, vector<2x8x32xf32> -> vector<2x8x32xf32>
    %c0_8 = arith.constant 0 : index
    %c0_9 = arith.constant 0 : index
    %c0_10 = arith.constant 0 : index
    %22 = vector.load %arg3[%c0_8, %c0_9, %c0_10] : memref<2x8x32xf32, #tpu.memory_space<vmem>>, vector<2x8x32xf32>
    tpu.vector_store %arg3[%c0_8, %c0_9, %c0_10], %21 {strides = array<i32>} : memref<2x8x32xf32, #tpu.memory_space<vmem>>, vector<2x8x32xf32>,
    %c0_11 = arith.constant 0 : index
    %c0_12 = arith.constant 0 : index
    %c0_13 = arith.constant 0 : index
    %23 = vector.load %arg4[%c0_11, %c0_12, %c0_13] : memref<2x8x8xf32, #tpu.memory_space<vmem>>, vector<2x8x8xf32>
    tpu.vector_store %arg4[%c0_11, %c0_12, %c0_13], %20 {strides = array<i32>} : memref<2x8x8xf32, #tpu.memory_space<vmem>>, vector<2x8x8xf32>,
    return
  }
  func.func @transform_0(%arg0: i32) -> (i32, i32, i32) {
    %c0_i32 = arith.constant 0 : i32
    %c0_i32_0 = arith.constant 0 : i32
    %c0_i32_1 = arith.constant 0 : i32
    return %arg0, %c0_i32, %c0_i32_0 : i32, i32, i32
  }
  func.func @transform_1(%arg0: i32) -> (i32, i32) {
    %c0_i32 = arith.constant 0 : i32
    %c0_i32_0 = arith.constant 0 : i32
    %c0_i32_1 = arith.constant 0 : i32
    return %c0_i32, %c0_i32_0 : i32, i32
  }
  func.func @transform_2(%arg0: i32) -> (i32, i32, i32) {
    %c0_i32 = arith.constant 0 : i32
    %c0_i32_0 = arith.constant 0 : i32
    %c0_i32_1 = arith.constant 0 : i32
    return %arg0, %c0_i32, %c0_i32_0 : i32, i32, i32
  }
  func.func @transform_3(%arg0: i32) -> (i32, i32, i32) {
    %c0_i32 = arith.constant 0 : i32
    %c0_i32_0 = arith.constant 0 : i32
    %c0_i32_1 = arith.constant 0 : i32
    return %arg0, %c0_i32, %c0_i32_0 : i32, i32, i32
  }
}

</mosaic_0001>

<llo_original>
// kernel: tpu_custom_call.1
$region0: #{tpu_custom_call.1}
  #allocation0 [shape = 'u32[]', space=smem, size = 0x4, offset = 0x4, fixed_abs, tag = 'smem constant byte address 0x4 - core index']
  #allocation1 [shape = 'u32[72,128]{1,0:T(1,128)}', space=vmem, size = 0x9000, scoped, tag = 'internal scratch']
  %s0 = inlined_call_operand.hbm [shape: f32[2,8,32], index: 0, kind: input, shape index: {}]
  %s1 = inlined_call_operand.hbm [shape: f32[32,96], index: 1, kind: input, shape index: {}]
  %s2 = inlined_call_operand.hbm [shape: f32[2,8,32], index: 2, kind: output, shape index: {0}]
  %s3 = inlined_call_operand.hbm [shape: f32[2,8,8], index: 3, kind: output, shape index: {1}]
  %4 = xla_tuple %s2, %s3
  %s5 = sld [smem:[#allocation0]]
  $region34: #{tpu_custom_call.1} parent=0
    _
  %s7 = ssub.s32 1, %s5
  %s8 = scalar_select 0, %s7, %s5
  $region1: #{tpu_custom_call.1} parent=0
    #allocation2 [shape = 'u8[8192]{0}', space=vmem, size = 0x2000, scoped, tag = 'input window, operand 0, single buffered']
    #allocation3 [shape = 's32[1]{0}', space=sflag, size = 0x4, scoped, tag = 'scoped memory for tpu_custom_call.1']
    #allocation4 [shape = 's32[1]{0}', space=sflag, size = 0x4, scoped, tag = 'scoped memory for tpu_custom_call.1']
    #allocation5 [shape = 'u8[16384]{0}', space=vmem, size = 0x4000, scoped, tag = 'input window, operand 1, single buffered']
    #allocation6 [shape = 's32[1]{0}', space=sflag, size = 0x4, scoped, tag = 'scoped memory for tpu_custom_call.1']
    #allocation7 [shape = 'u8[8192]{0}', space=vmem, size = 0x2000, scoped, tag = 'output window, operand 0, single buffered']
    #allocation8 [shape = 'u8[8192]{0}', space=vmem, size = 0x2000, scoped, tag = 'output window, operand 1, single buffered']
    #allocation9 [shape = 's32[1]{0}', space=sflag, size = 0x4, scoped, tag = 'scoped memory for tpu_custom_call.1']
    %9 = vsyncpa [#allocation3], 0
    %10 = vsyncpa [#allocation6], 0
    %11 = vsyncpa [#allocation4], 0
    %12 = vsyncpa [#allocation9], 0
    // Predicated region
    $region2: #{tpu_custom_call.1} parent=1 // pred_check
      _
    $region3: #{tpu_custom_call.1} parent=1 // pred_check_branch
      %14 = sbr.rel (0) target = $region5
    $region4: #{tpu_custom_call.1} parent=1 // pred_region
      %16 = vsyncadd [#allocation3], 0
      %s17 = sshll.u32 %s0, 4
      %s18 = int_to_ptr.hbm [resolvable:$true] %s17
      %s19 = sshll.u32 [#allocation2], 4
      %s20 = int_to_ptr.vmem [resolvable:$true] %s19
      %25 = dma.hbm_to_vmem [thread:$0]  %s18, 256, %s20, [#allocation3], 128, 128, 8
    $region5: #{tpu_custom_call.1} parent=1 // pred_fallthru
      _
    // Predicated region
    $region6: #{tpu_custom_call.1} parent=1 // pred_check
      _
    $region7: #{tpu_custom_call.1} parent=1 // pred_check_branch
      %27 = sbr.rel (0) target = $region9
    $region8: #{tpu_custom_call.1} parent=1 // pred_region
      %29 = vsyncadd [#allocation6], 0
      %s30 = sshll.u32 %s1, 4
      %s31 = int_to_ptr.hbm [resolvable:$true] %s30
      %s32 = sshll.u32 [#allocation5], 4
      %s33 = int_to_ptr.vmem [resolvable:$true] %s32
      %38 = dma.hbm_to_vmem [thread:$0]  %s31, 512, %s33, [#allocation6], 128, 128, 8
    $region9: #{tpu_custom_call.1} parent=1 // pred_fallthru
      _
    // Predicated region
    $region10: #{tpu_custom_call.1} parent=1 // pred_check
      _
    $region11: #{tpu_custom_call.1} parent=1 // pred_check_branch
      %40 = sbr.rel (0) target = $region13
    $region12: #{tpu_custom_call.1} parent=1 // pred_region
      %42 = dma.done [#allocation3], 256
    $region13: #{tpu_custom_call.1} parent=1 // pred_fallthru
      _
    // Predicated region
    $region14: #{tpu_custom_call.1} parent=1 // pred_check
      _
    $region15: #{tpu_custom_call.1} parent=1 // pred_check_branch
      %44 = sbr.rel (0) target = $region17
    $region16: #{tpu_custom_call.1} parent=1 // pred_region
      %46 = dma.done [#allocation6], 512
    $region17: #{tpu_custom_call.1} parent=1 // pred_fallthru
      _
    %v47 = vld [vmem:[#allocation2] sm:$0xff]
    %v48 = vld [vmem:[#allocation2 + $0x8] sm:$0xff]
    %v49 = vld [vmem:[#allocation5] sm:$0xff]
    %v50 = vld [vmem:[#allocation5 + $0x8] sm:$0xff]
    %v51 = vld [vmem:[#allocation5 + $0x10] sm:$0xff]
    %v52 = vld [vmem:[#allocation5 + $0x18] sm:$0xff]
    %vm53 = vcmask 261120
    %v55 = vsel %vm53, %v47, 0
    %v58 = vsel %vm53, %v48, 0
    %60 = vmatpush.msra.mxu0 0.0
    %61 = vmatpush.msra.mxu0 0.0
    %62 = vmatpush.msra.mxu0 0.0
    %63 = vmatpush.msra.mxu0 0.0
    %64 = vmatpush.msra.mxu0 0.0
    %65 = vmatpush.msra.mxu0 0.0
    %66 = vmatpush.msra.mxu0 0.0
    %67 = vmatpush.msra.mxu0 0.0
    %68 = vmatpush.msra.mxu0 0.0
    %69 = vmatpush.msra.mxu0 0.0
    %70 = vmatpush.msra.mxu0 0.0
    %71 = vmatpush.msra.mxu0 0.0
    %72 = vmatpush.msra.mxu0 %v52
    %73 = vmatpush.msra.mxu0 %v51
    %74 = vmatpush.msra.mxu0 %v50
    %75 = vmatpush.msra.mxu0 %v49
    %76 = vmatmul.f32.gmra.mxu0 %v55
    %v77 = vpop.f32.mrf.mxu0
    %v78 = vadd.f32 0.0, %v77
    %79 = vmatmul.f32.gmra.mxu0 %v58
    %v80 = vpop.f32.mrf.mxu0
    %v81 = vadd.f32 0.0, %v80
    %82 = vdwg.mxu0
    %84 = vrot.lane.b32.xlu0 %v78, 96
    %v85 = vpop.permute.xlu0 %84
    %v86 = vsel %vm53, %v78, 0
    %v88 = vsel %vm53, %v85, 0
    %90 = vmatpush.xpose.msra.mxu0 0.0
    %91 = vmatpush.xpose.msra.mxu0 0.0
    %92 = vmatpush.xpose.msra.mxu0 0.0
    %93 = vmatpush.xpose.msra.mxu0 0.0
    %94 = vmatpush.xpose.msra.mxu0 0.0
    %95 = vmatpush.xpose.msra.mxu0 0.0
    %96 = vmatpush.xpose.msra.mxu0 0.0
    %97 = vmatpush.xpose.msra.mxu0 0.0
    %98 = vmatpush.xpose.msra.mxu0 0.0
    %99 = vmatpush.xpose.msra.mxu0 0.0
    %100 = vmatpush.xpose.msra.mxu0 0.0
    %101 = vmatpush.xpose.msra.mxu0 0.0
    %102 = vmatpush.xpose.msra.mxu0 0.0
    %103 = vmatpush.xpose.msra.mxu0 0.0
    %104 = vmatpush.xpose.msra.mxu0 0.0
    %105 = vmatpush.xpose.msra.mxu0 %v88
    %106 = vmatmul.f32.gmra.mxu0 %v86
    %v107 = vpop.f32.mrf.mxu0
    %v108 = vadd.f32 0.0, %v107
    %109 = vdwg.mxu0
    %111 = vrot.lane.b32.xlu0 %v81, 96
    %v112 = vpop.permute.xlu0 %111
    %v113 = vsel %vm53, %v81, 0
    %v115 = vsel %vm53, %v112, 0
    %117 = vmatpush.xpose.msra.mxu0 0.0
    %118 = vmatpush.xpose.msra.mxu0 0.0
    %119 = vmatpush.xpose.msra.mxu0 0.0
    %120 = vmatpush.xpose.msra.mxu0 0.0
    %121 = vmatpush.xpose.msra.mxu0 0.0
    %122 = vmatpush.xpose.msra.mxu0 0.0
    %123 = vmatpush.xpose.msra.mxu0 0.0
    %124 = vmatpush.xpose.msra.mxu0 0.0
    %125 = vmatpush.xpose.msra.mxu0 0.0
    %126 = vmatpush.xpose.msra.mxu0 0.0
    %127 = vmatpush.xpose.msra.mxu0 0.0
    %128 = vmatpush.xpose.msra.mxu0 0.0
    %129 = vmatpush.xpose.msra.mxu0 0.0
    %130 = vmatpush.xpose.msra.mxu0 0.0
    %131 = vmatpush.xpose.msra.mxu0 0.0
    %132 = vmatpush.xpose.msra.mxu0 %v115
    %133 = vmatmul.f32.gmra.mxu0 %v113
    %v134 = vpop.f32.mrf.mxu0
    %v135 = vadd.f32 0.0, %v134
    %136 = vdwg.mxu0
    %vm137 = vcmask 64512
    %v138 = vsel %vm137, %v108, -inf
    %139 = vmax.xlane.f32.xlu0 %v138
    %v140 = vpop.xlane.xlu0 %139
    %v141 = vsel %vm137, %v135, -inf
    %142 = vmax.xlane.f32.xlu0 %v141
    %v143 = vpop.xlane.xlu0 %142
    %v144 = vsub.f32 %v108, %v140
    %v145 = vsub.f32 %v135, %v143
    %v146 = vmul.f32 %v144, 1.442695
    %v147 = vpow.pop %v146
    %v148 = vmul.f32 %v145, 1.442695
    %v149 = vpow.pop %v148
    %v150 = vsel %vm137, %v147, 0.0
    %151 = vadd.xlane.f32.xlu0 %v150
    %v152 = vpop.xlane.xlu0 %151
    %v153 = vsel %vm137, %v149, 0.0
    %154 = vadd.xlane.f32.xlu0 %v153
    %v155 = vpop.xlane.xlu0 %154
    %v156 = vrcp.pop %v152
    %v157 = vrcp.pop %v155
    %v158 = vmul.f32 %v147, %v156
    %v159 = vmul.f32 %v149, %v157
    %160 = vrot.lane.b32.xlu0 %v78, 64
    %v161 = vpop.permute.xlu0 %160
    %v164 = vsel %vm137, %v158, 0
    %166 = vmatpush.msra.mxu0 0.0
    %167 = vmatpush.msra.mxu0 0.0
    %168 = vmatpush.msra.mxu0 0.0
    %169 = vmatpush.msra.mxu0 0.0
    %170 = vmatpush.msra.mxu0 0.0
    %171 = vmatpush.msra.mxu0 0.0
    %172 = vmatpush.msra.mxu0 0.0
    %173 = vmatpush.msra.mxu0 0.0
    %174 = vmatpush.msra.mxu0 0.0
    %175 = vmatpush.msra.mxu0 0.0
    %176 = vmatpush.msra.mxu0 0.0
    %177 = vmatpush.msra.mxu0 0.0
    %178 = vmatpush.msra.mxu0 0.0
    %179 = vmatpush.msra.mxu0 0.0
    %180 = vmatpush.msra.mxu0 0.0
    %181 = vmatpush.msra.mxu0 %v161
    %182 = vmatmul.f32.gmra.mxu0 %v164
    %v183 = vpop.f32.mrf.mxu0
    %v184 = vadd.f32 0.0, %v183
    %185 = vdwg.mxu0
    %186 = vrot.lane.b32.xlu0 %v81, 64
    %v187 = vpop.permute.xlu0 %186
    %v190 = vsel %vm137, %v159, 0
    %192 = vmatpush.msra.mxu0 0.0
    %193 = vmatpush.msra.mxu0 0.0
    %194 = vmatpush.msra.mxu0 0.0
    %195 = vmatpush.msra.mxu0 0.0
    %196 = vmatpush.msra.mxu0 0.0
    %197 = vmatpush.msra.mxu0 0.0
    %198 = vmatpush.msra.mxu0 0.0
    %199 = vmatpush.msra.mxu0 0.0
    %200 = vmatpush.msra.mxu0 0.0
    %201 = vmatpush.msra.mxu0 0.0
    %202 = vmatpush.msra.mxu0 0.0
    %203 = vmatpush.msra.mxu0 0.0
    %204 = vmatpush.msra.mxu0 0.0
    %205 = vmatpush.msra.mxu0 0.0
    %206 = vmatpush.msra.mxu0 0.0
    %207 = vmatpush.msra.mxu0 %v187
    %208 = vmatmul.f32.gmra.mxu0 %v190
    %v209 = vpop.f32.mrf.mxu0
    %v210 = vadd.f32 0.0, %v209
    %211 = vdwg.mxu0
    %212 = vst.msk [vmem:[#allocation7] sm:$0xff] %vm53, %v184
    %213 = vst.msk [vmem:[#allocation7 + $0x8] sm:$0xff] %vm53, %v210
    %214 = vst.msk [vmem:[#allocation8] sm:$0xff] %vm137, %v158
    %215 = vst.msk [vmem:[#allocation8 + $0x8] sm:$0xff] %vm137, %v159
    // Predicated region
    $region18: #{tpu_custom_call.1} parent=1 // pred_check
      _
    $region19: #{tpu_custom_call.1} parent=1 // pred_check_branch
      %217 = sbr.rel (0) target = $region21
    $region20: #{tpu_custom_call.1} parent=1 // pred_region
      %219 = vsyncadd [#allocation4], 0
      %s220 = sshll.u32 [#allocation7], 4
      %s221 = int_to_ptr.vmem [resolvable:$true] %s220
      %s222 = sshll.u32 %s2, 4
      %s223 = int_to_ptr.hbm [resolvable:$true] %s222
      %228 = dma.vmem_to_hbm [thread:$0]  %s221, 256, %s223, [#allocation4], 128, 128, 8
    $region21: #{tpu_custom_call.1} parent=1 // pred_fallthru
      _
    // Predicated region
    $region22: #{tpu_custom_call.1} parent=1 // pred_check
      _
    $region23: #{tpu_custom_call.1} parent=1 // pred_check_branch
      %230 = sbr.rel (0) target = $region25
    $region24: #{tpu_custom_call.1} parent=1 // pred_region
      %232 = vsyncadd [#allocation9], 0
      %s233 = sshll.u32 [#allocation8], 4
      %s234 = int_to_ptr.vmem [resolvable:$true] %s233
      %s235 = sshll.u32 %s3, 4
      %s236 = int_to_ptr.hbm [resolvable:$true] %s235
      %241 = dma.vmem_to_hbm [thread:$0]  %s234, 256, %s236, [#allocation9], 128, 128, 8
    $region25: #{tpu_custom_call.1} parent=1 // pred_fallthru
      _
    // Predicated region
    $region26: #{tpu_custom_call.1} parent=1 // pred_check
      _
    $region27: #{tpu_custom_call.1} parent=1 // pred_check_branch
      %243 = sbr.rel (0) target = $region29
    $region28: #{tpu_custom_call.1} parent=1 // pred_region
      %245 = dma.done [#allocation4], 256
    $region29: #{tpu_custom_call.1} parent=1 // pred_fallthru
      _
    // Predicated region
    $region30: #{tpu_custom_call.1} parent=1 // pred_check
      _
    $region31: #{tpu_custom_call.1} parent=1 // pred_check_branch
      %247 = sbr.rel (0) target = $region33
    $region32: #{tpu_custom_call.1} parent=1 // pred_region
      %249 = dma.done [#allocation9], 256
    $region33: #{tpu_custom_call.1} parent=1 // pred_fallthru
      _
    %250 = vsyncpa [#allocation3], 1
    %251 = vsyncpa [#allocation6], 1
    %252 = vsyncpa [#allocation4], 1
    %253 = vsyncpa [#allocation9], 1

</llo_original>
